<compile_context>
chip_gen: v6e
topology: v6e:2x2x1
jax: 0.10.0
libtpu: 0.0.40
codegen_flags: <defaults>
</compile_context>

<pallas_src>
import jax
import jax.numpy as jnp
from jax.experimental import pallas as pl
from jax.experimental.pallas import tpu as pltpu


def _make_mlp_kernel(n_hidden):
    """Fused kernel: stacked one-hot gather + folded layer 0 + hidden layers + head."""

    def kernel(uidx_ref, iidx_ref, t0_ref, b0_ref, *rest):
        hidden_refs = rest[: 2 * (n_hidden - 1)]
        wout_ref, bout_ref, o_ref = rest[2 * (n_hidden - 1):]

        tile_b = uidx_ref.shape[1]
        n_vocab = t0_ref.shape[1]

        # Stacked one-hot gather: column b has 1s at rows user[b] and
        # n_users + item[b] (item indices are pre-offset in the wrapper).
        rows = jax.lax.broadcasted_iota(jnp.int32, (n_vocab, tile_b), 0)
        oh = jnp.logical_or(rows == uidx_ref[...],
                            rows == iidx_ref[...]).astype(jnp.bfloat16)

        # Layer 0 folded with the embedding gather:
        #   relu(cat(U[u], I[i]) @ W0 + b0) == relu(T0 @ onehot + b0)
        # with T0 = [U @ W0u ; I @ W0i]^T precomputed in the wrapper.
        h = (jnp.dot(t0_ref[...], oh, preferred_element_type=jnp.float32)
             + b0_ref[...])                                   # (32, TILE_B) f32
        h = jnp.maximum(h, 0.0)

        # Remaining hidden layers (Linear + ReLU): W^T @ h, bf16 / f32-acc.
        for li in range(n_hidden - 1):
            w_ref = hidden_refs[2 * li]
            b_ref = hidden_refs[2 * li + 1]
            h = (jnp.dot(w_ref[...], h.astype(jnp.bfloat16),
                         preferred_element_type=jnp.float32) + b_ref[...])
            h = jnp.maximum(h, 0.0)

        # Final Linear (F_last -> 1): (1, F_last) @ (F_last, TILE_B) is already
        # the lane-dense (1, TILE_B) output row.
        logits = (jnp.dot(wout_ref[...], h.astype(jnp.bfloat16),
                          preferred_element_type=jnp.float32) + bout_ref[...])
        o_ref[...] = logits.astype(o_ref.dtype)

    return kernel


def _tensorcores_per_chip():
    """Best-effort TensorCores-per-device detection (v7x/megacore -> 2)."""
    try:
        kind = jax.devices()[0].device_kind.lower()
    except Exception:
        return 1
    if "v7" in kind or "v4" in kind:
        return 2
    if kind.strip() in ("tpu v5", "tpu v5p"):
        return 2
    return 1          # v5e / v6e: single TensorCore per chip


def _pick_tile_b(batch_padded, n_cores):
    """Single grid step on 1-TC chips; two balanced 'parallel' steps on 2-TC chips."""
    if n_cores >= 2:
        half = batch_padded // 2
        if half >= 128 and half % 128 == 0:
            return half
    return batch_padded


def mlp_forward(user_idx, item_idx, user_emb, item_emb, mlp_params, *,
                tile_b=None):
    """Fused forward: logits[b] = Linear(MLP(concat(U[user[b]], I[item[b]])))."""
    n_users, n_features = user_emb.shape
    n_hidden = len(mlp_params) - 1
    assert n_hidden >= 1
    B = int(user_idx.shape[0])

    # Pad batch up to a multiple of the 128-lane width, then pick the tile.
    bp = pl.cdiv(B, 128) * 128
    if tile_b is None:
        tile_b = _pick_tile_b(bp, _tensorcores_per_chip())
    assert tile_b % 128 == 0, "tile_b must be a multiple of the 128-lane width"
    num_tiles = pl.cdiv(bp, tile_b)
    bp = num_tiles * tile_b

    # Lane-dense (1, bp) index rows; item indices pre-offset into the stacked
    # table.  Padded columns point at valid rows and are sliced off at the end.
    uidx = jnp.zeros((1, bp), jnp.int32).at[0, :B].set(user_idx.astype(jnp.int32))
    iidx = jnp.full((1, bp), n_users, jnp.int32).at[0, :B].set(
        item_idx.astype(jnp.int32) + n_users)

    # Fold embeddings into layer 0 (f32 matmul, single bf16 rounding):
    #   cat(U[u], I[i]) @ W0 == (U @ W0u)[u] + (I @ W0i)[i]
    w0, b0 = mlp_params[0]                                    # (2F, 32), (1, 32)
    tu = user_emb.astype(jnp.float32) @ w0[:n_features].astype(jnp.float32)
    ti = item_emb.astype(jnp.float32) @ w0[n_features:].astype(jnp.float32)
    t0 = jnp.concatenate([tu, ti], axis=0).T.astype(jnp.bfloat16)  # (32, n_u+n_i)
    b0t = b0.reshape(-1, 1).astype(jnp.float32)               # (32, 1)

    # Hidden / output weights pre-transposed so the kernel computes W^T @ h.
    hidden = []
    for (w, b) in mlp_params[1:-1]:
        hidden += [w.T.astype(jnp.bfloat16), b.reshape(-1, 1).astype(jnp.float32)]
    w_last, b_last = mlp_params[-1]
    w_out = w_last.T.astype(jnp.bfloat16)                     # (1, F_last)
    b_out = b_last.reshape(1, 1).astype(jnp.float32)          # (1, 1)

    args = (uidx, iidx, t0, b0t, *hidden, w_out, b_out)

    def const_spec(a):
        nd = a.ndim
        return pl.BlockSpec(a.shape, lambda i, _nd=nd: (0,) * _nd)

    in_specs = (
        [pl.BlockSpec((1, tile_b), lambda i: (0, i)),   # user indices (lane-dense)
         pl.BlockSpec((1, tile_b), lambda i: (0, i))]   # item indices (lane-dense)
        + [const_spec(a) for a in args[2:]]             # weights resident in VMEM
    )

    out = pl.pallas_call(
        _make_mlp_kernel(n_hidden),
        out_shape=jax.ShapeDtypeStruct((1, bp), jnp.float32),
        grid=(num_tiles,),
        in_specs=in_specs,
        out_specs=pl.BlockSpec((1, tile_b), lambda i: (0, i)),
        compiler_params=pltpu.CompilerParams(
            dimension_semantics=("parallel",)),
    )(*args)

    return out[0, :B].reshape(B, 1)


def init_params(key, n_users, n_items, n_features):
    """Deterministic parameter construction mirroring MLP.__init__."""
    layers = [32 // 2 ** i for i in range(6) if 32 // 2 ** i >= n_features]
    # The original module feeds the layer-stack output (width layers[-1]) into
    # Linear(n_features, 1); this only type-checks when layers[-1] == n_features.
    assert layers[-1] == n_features, "spec requires layer stack to end at n_features"

    dims = ([(2 * n_features, 32)] + list(zip(layers, layers[1:]))
            + [(n_features, 1)])

    keys = jax.random.split(key, 2 + len(dims))
    user_emb = 0.01 * jax.random.normal(keys[0], (n_users, n_features), jnp.float32)
    item_emb = 0.01 * jax.random.normal(keys[1], (n_items, n_features), jnp.float32)

    def linear_init(k, fan_in, fan_out):
        # PyTorch nn.Linear default: U(-1/sqrt(fan_in), 1/sqrt(fan_in))
        kw, kb = jax.random.split(k)
        bound = 1.0 / float(fan_in) ** 0.5
        w = jax.random.uniform(kw, (fan_in, fan_out), jnp.float32, -bound, bound)
        b = jax.random.uniform(kb, (1, fan_out), jnp.float32, -bound, bound)
        return w, b

    mlp_params = [linear_init(keys[2 + i], fi, fo) for i, (fi, fo) in enumerate(dims)]
    return user_emb, item_emb, mlp_params


if __name__ == "__main__":
    n_users, n_items, n_features = 64, 64, 8
    batch = 512

    key = jax.random.PRNGKey(0)
    k_param, k_u, k_i = jax.random.split(key, 3)

    user_emb, item_emb, mlp_params = init_params(k_param, n_users, n_items,
                                                 n_features)
    user_indices = jax.random.randint(k_u, (batch,), 0, n_users)
    item_indices = jax.random.randint(k_i, (batch,), 0, n_items)

    out = mlp_forward(user_indices, item_indices, user_emb, item_emb, mlp_params)
    jax.block_until_ready(out)
    assert out.shape == (batch, 1)

    # Pure-f32 reference mirroring the PyTorch module semantics
    # (embedding gather + concat + Linear/ReLU stack + final Linear).
    u = jnp.take(user_emb, user_indices, axis=0)
    it = jnp.take(item_emb, item_indices, axis=0)
    h = jnp.concatenate([u, it], axis=1)
    for li, (w, b) in enumerate(mlp_params):
        h = h @ w + b
        if li < len(mlp_params) - 1:
            h = jnp.maximum(h, 0.0)
    ref = h  # (B, 1) f32

    err = jnp.max(jnp.abs(out - ref))
    assert jnp.allclose(out, ref, atol=2e-2, rtol=2e-2), f"max abs err {err}"
    print("KERNEL_OK")
</pallas_src>

<mosaic_0001>
module attributes {stable_mosaic.version = 11 : i64} {
  func.func @kernel(%arg0: i32, %arg1: memref<1x512xi32, #tpu.memory_space<vmem>>, %arg2: memref<1x512xi32, #tpu.memory_space<vmem>>, %arg3: memref<32x128xbf16, #tpu.memory_space<vmem>>, %arg4: memref<32x1xf32, #tpu.memory_space<vmem>>, %arg5: memref<16x32xbf16, #tpu.memory_space<vmem>>, %arg6: memref<16x1xf32, #tpu.memory_space<vmem>>, %arg7: memref<8x16xbf16, #tpu.memory_space<vmem>>, %arg8: memref<8x1xf32, #tpu.memory_space<vmem>>, %arg9: memref<1x8xbf16, #tpu.memory_space<vmem>>, %arg10: memref<1x1xf32, #tpu.memory_space<vmem>>, %arg11: memref<1x512xf32, #tpu.memory_space<vmem>>) attributes {dimension_semantics = [#tpu.dimension_semantics<parallel>], iteration_bounds = array<i64: 1>, scalar_prefetch = 0 : i64, scratch_operands = 0 : i64, tpu.core_type = #tpu.core_type<tc>, window_params = [{transform_indices = @transform_0, window_bounds = array<i64: 1, 512>}, {transform_indices = @transform_1, window_bounds = array<i64: 1, 512>}, {pipeline_mode = #tpu.pipeline_mode<synchronous>, transform_indices = @transform_2, window_bounds = array<i64: 32, 128>}, {pipeline_mode = #tpu.pipeline_mode<synchronous>, transform_indices = @transform_3, window_bounds = array<i64: 32, 1>}, {pipeline_mode = #tpu.pipeline_mode<synchronous>, transform_indices = @transform_4, window_bounds = array<i64: 16, 32>}, {pipeline_mode = #tpu.pipeline_mode<synchronous>, transform_indices = @transform_5, window_bounds = array<i64: 16, 1>}, {pipeline_mode = #tpu.pipeline_mode<synchronous>, transform_indices = @transform_6, window_bounds = array<i64: 8, 16>}, {pipeline_mode = #tpu.pipeline_mode<synchronous>, transform_indices = @transform_7, window_bounds = array<i64: 8, 1>}, {pipeline_mode = #tpu.pipeline_mode<synchronous>, transform_indices = @transform_8, window_bounds = array<i64: 1, 8>}, {pipeline_mode = #tpu.pipeline_mode<synchronous>, transform_indices = @transform_9, window_bounds = array<i64: 1, 1>}, {transform_indices = @transform_10, window_bounds = array<i64: 1, 512>}]} {
    %0 = tpu.iota {dimensions = array<i32: 0>} : vector<128x512xi32>
    %c0 = arith.constant 0 : index
    %c0_0 = arith.constant 0 : index
    %1 = vector.load %arg1[%c0, %c0_0] : memref<1x512xi32, #tpu.memory_space<vmem>>, vector<1x512xi32>
    %2 = vector.broadcast %1 : vector<1x512xi32> to vector<128x512xi32>
    %3 = arith.cmpi eq, %0, %2 : vector<128x512xi32>
    %c0_1 = arith.constant 0 : index
    %c0_2 = arith.constant 0 : index
    %4 = vector.load %arg2[%c0_1, %c0_2] : memref<1x512xi32, #tpu.memory_space<vmem>>, vector<1x512xi32>
    %5 = vector.broadcast %4 : vector<1x512xi32> to vector<128x512xi32>
    %6 = arith.cmpi eq, %0, %5 : vector<128x512xi32>
    %7 = arith.ori %3, %6 : vector<128x512xi1>
    %8 = arith.extui %7 : vector<128x512xi1> to vector<128x512xi32>
    %9 = arith.sitofp %8 : vector<128x512xi32> to vector<128x512xf32>
    %10 = arith.truncf %9 : vector<128x512xf32> to vector<128x512xbf16>
    %c0_3 = arith.constant 0 : index
    %c0_4 = arith.constant 0 : index
    %11 = vector.load %arg3[%c0_3, %c0_4] : memref<32x128xbf16, #tpu.memory_space<vmem>>, vector<32x128xbf16>
    %cst = arith.constant dense<0.000000e+00> : vector<32x512xf32>
    %12 = tpu.matmul %11, %10, %cst {dimension_numbers = #tpu.dot_dimension_numbers<[1], [0], [0], [1], [0, 0, 1, 1], [], []>} : vector<32x128xbf16>, vector<128x512xbf16>, vector<32x512xf32> -> vector<32x512xf32>
    %c0_5 = arith.constant 0 : index
    %c0_6 = arith.constant 0 : index
    %13 = vector.load %arg4[%c0_5, %c0_6] : memref<32x1xf32, #tpu.memory_space<vmem>>, vector<32x1xf32>
    %14 = vector.broadcast %13 : vector<32x1xf32> to vector<32x512xf32>
    %15 = arith.addf %12, %14 : vector<32x512xf32>
    %cst_7 = arith.constant 0.000000e+00 : f32
    %16 = vector.broadcast %cst_7 : f32 to vector<32x512xf32>
    %17 = arith.maximumf %15, %16 : vector<32x512xf32>
    %c0_8 = arith.constant 0 : index
    %c0_9 = arith.constant 0 : index
    %18 = vector.load %arg5[%c0_8, %c0_9] : memref<16x32xbf16, #tpu.memory_space<vmem>>, vector<16x32xbf16>
    %19 = arith.truncf %17 : vector<32x512xf32> to vector<32x512xbf16>
    %cst_10 = arith.constant dense<0.000000e+00> : vector<16x512xf32>
    %20 = tpu.matmul %18, %19, %cst_10 {dimension_numbers = #tpu.dot_dimension_numbers<[1], [0], [0], [1], [0, 0, 1, 1], [], []>} : vector<16x32xbf16>, vector<32x512xbf16>, vector<16x512xf32> -> vector<16x512xf32>
    %c0_11 = arith.constant 0 : index
    %c0_12 = arith.constant 0 : index
    %21 = vector.load %arg6[%c0_11, %c0_12] : memref<16x1xf32, #tpu.memory_space<vmem>>, vector<16x1xf32>
    %22 = vector.broadcast %21 : vector<16x1xf32> to vector<16x512xf32>
    %23 = arith.addf %20, %22 : vector<16x512xf32>
    %cst_13 = arith.constant 0.000000e+00 : f32
    %24 = vector.broadcast %cst_13 : f32 to vector<16x512xf32>
    %25 = arith.maximumf %23, %24 : vector<16x512xf32>
    %c0_14 = arith.constant 0 : index
    %c0_15 = arith.constant 0 : index
    %26 = vector.load %arg7[%c0_14, %c0_15] : memref<8x16xbf16, #tpu.memory_space<vmem>>, vector<8x16xbf16>
    %27 = arith.truncf %25 : vector<16x512xf32> to vector<16x512xbf16>
    %cst_16 = arith.constant dense<0.000000e+00> : vector<8x512xf32>
    %28 = tpu.matmul %26, %27, %cst_16 {dimension_numbers = #tpu.dot_dimension_numbers<[1], [0], [0], [1], [0, 0, 1, 1], [], []>} : vector<8x16xbf16>, vector<16x512xbf16>, vector<8x512xf32> -> vector<8x512xf32>
    %c0_17 = arith.constant 0 : index
    %c0_18 = arith.constant 0 : index
    %29 = vector.load %arg8[%c0_17, %c0_18] : memref<8x1xf32, #tpu.memory_space<vmem>>, vector<8x1xf32>
    %30 = vector.broadcast %29 : vector<8x1xf32> to vector<8x512xf32>
    %31 = arith.addf %28, %30 : vector<8x512xf32>
    %cst_19 = arith.constant 0.000000e+00 : f32
    %32 = vector.broadcast %cst_19 : f32 to vector<8x512xf32>
    %33 = arith.maximumf %31, %32 : vector<8x512xf32>
    %c0_20 = arith.constant 0 : index
    %c0_21 = arith.constant 0 : index
    %34 = vector.load %arg9[%c0_20, %c0_21] : memref<1x8xbf16, #tpu.memory_space<vmem>>, vector<1x8xbf16>
    %35 = arith.truncf %33 : vector<8x512xf32> to vector<8x512xbf16>
    %cst_22 = arith.constant dense<0.000000e+00> : vector<1x512xf32>
    %36 = tpu.matmul %34, %35, %cst_22 {dimension_numbers = #tpu.dot_dimension_numbers<[1], [0], [0], [1], [0, 0, 1, 1], [], []>} : vector<1x8xbf16>, vector<8x512xbf16>, vector<1x512xf32> -> vector<1x512xf32>
    %c0_23 = arith.constant 0 : index
    %c0_24 = arith.constant 0 : index
    %37 = vector.load %arg10[%c0_23, %c0_24] : memref<1x1xf32, #tpu.memory_space<vmem>>, vector<1x1xf32>
    %38 = vector.broadcast %37 : vector<1x1xf32> to vector<1x512xf32>
    %39 = arith.addf %36, %38 : vector<1x512xf32>
    %c0_25 = arith.constant 0 : index
    %c0_26 = arith.constant 0 : index
    %40 = vector.load %arg11[%c0_25, %c0_26] : memref<1x512xf32, #tpu.memory_space<vmem>>, vector<1x512xf32>
    tpu.vector_store %arg11[%c0_25, %c0_26], %39 {strides = array<i32>} : memref<1x512xf32, #tpu.memory_space<vmem>>, vector<1x512xf32>,
    return
  }
  func.func @transform_0(%arg0: i32) -> (i32, i32) {
    %c0_i32 = arith.constant 0 : i32
    %c0_i32_0 = arith.constant 0 : i32
    return %c0_i32, %arg0 : i32, i32
  }
  func.func @transform_1(%arg0: i32) -> (i32, i32) {
    %c0_i32 = arith.constant 0 : i32
    %c0_i32_0 = arith.constant 0 : i32
    return %c0_i32, %arg0 : i32, i32
  }
  func.func @transform_2(%arg0: i32) -> (i32, i32) {
    %c0_i32 = arith.constant 0 : i32
    %c0_i32_0 = arith.constant 0 : i32
    %c0_i32_1 = arith.constant 0 : i32
    return %c0_i32, %c0_i32_0 : i32, i32
  }
  func.func @transform_3(%arg0: i32) -> (i32, i32) {
    %c0_i32 = arith.constant 0 : i32
    %c0_i32_0 = arith.constant 0 : i32
    %c0_i32_1 = arith.constant 0 : i32
    return %c0_i32, %c0_i32_0 : i32, i32
  }
  func.func @transform_4(%arg0: i32) -> (i32, i32) {
    %c0_i32 = arith.constant 0 : i32
    %c0_i32_0 = arith.constant 0 : i32
    %c0_i32_1 = arith.constant 0 : i32
    return %c0_i32, %c0_i32_0 : i32, i32
  }
  func.func @transform_5(%arg0: i32) -> (i32, i32) {
    %c0_i32 = arith.constant 0 : i32
    %c0_i32_0 = arith.constant 0 : i32
    %c0_i32_1 = arith.constant 0 : i32
    return %c0_i32, %c0_i32_0 : i32, i32
  }
  func.func @transform_6(%arg0: i32) -> (i32, i32) {
    %c0_i32 = arith.constant 0 : i32
    %c0_i32_0 = arith.constant 0 : i32
    %c0_i32_1 = arith.constant 0 : i32
    return %c0_i32, %c0_i32_0 : i32, i32
  }
  func.func @transform_7(%arg0: i32) -> (i32, i32) {
    %c0_i32 = arith.constant 0 : i32
    %c0_i32_0 = arith.constant 0 : i32
    %c0_i32_1 = arith.constant 0 : i32
    return %c0_i32, %c0_i32_0 : i32, i32
  }
  func.func @transform_8(%arg0: i32) -> (i32, i32) {
    %c0_i32 = arith.constant 0 : i32
    %c0_i32_0 = arith.constant 0 : i32
    %c0_i32_1 = arith.constant 0 : i32
    return %c0_i32, %c0_i32_0 : i32, i32
  }
  func.func @transform_9(%arg0: i32) -> (i32, i32) {
    %c0_i32 = arith.constant 0 : i32
    %c0_i32_0 = arith.constant 0 : i32
    %c0_i32_1 = arith.constant 0 : i32
    return %c0_i32, %c0_i32_0 : i32, i32
  }
  func.func @transform_10(%arg0: i32) -> (i32, i32) {
    %c0_i32 = arith.constant 0 : i32
    %c0_i32_0 = arith.constant 0 : i32
    return %c0_i32, %arg0 : i32, i32
  }
}

</mosaic_0001>

<llo_original>
// kernel: tpu_custom_call.1
$region0: #{tpu_custom_call.1}
  #allocation0 [shape = 'u32[]', space=smem, size = 0x4, offset = 0x4, fixed_abs, tag = 'smem constant byte address 0x4 - core index']
  #allocation1 [shape = 'u32[144,128]{1,0:T(1,128)}', space=vmem, size = 0x12000, scoped, tag = 'internal scratch']
  #allocation2 [shape = 'f32[1,1]{1,0:T(1,128)S(1)}', space=vmem, size = 0x200, scoped, tag = 'scoped memory for tpu_custom_call.1']
  %s0 = inlined_call_operand.vmem [shape: s32[1,512], index: 0, kind: input, shape index: {}]
  %s1 = inlined_call_operand.vmem [shape: s32[1,512], index: 1, kind: input, shape index: {}]
  %s2 = inlined_call_operand.vmem [shape: bf16[32,128], index: 2, kind: input, shape index: {}]
  %s3 = inlined_call_operand.vmem [shape: f32[32,1], index: 3, kind: input, shape index: {}]
  %s4 = inlined_call_operand.vmem [shape: bf16[16,32], index: 4, kind: input, shape index: {}]
  %s5 = inlined_call_operand.vmem [shape: f32[16,1], index: 5, kind: input, shape index: {}]
  %s6 = inlined_call_operand.vmem [shape: bf16[8,16], index: 6, kind: input, shape index: {}]
  %s7 = inlined_call_operand.vmem [shape: f32[8,1], index: 7, kind: input, shape index: {}]
  %s8 = inlined_call_operand.vmem [shape: bf16[1,8], index: 8, kind: input, shape index: {}]
  %s9 = inlined_call_operand.<no memory space> [shape: f32[1,1], index: 9, kind: input, shape index: {}]
  %s10 = inlined_call_operand.hbm [shape: f32[1,512], index: 10, kind: output, shape index: {}]
  %s11 = sld [smem:[#allocation0]]
  $region50: #{tpu_custom_call.1} parent=0
    _
  %s13 = ssub.s32 1, %s11
  %s14 = scalar_select 0, %s13, %s11
  %v15 = vstv %s9
  %16 = vst [vmem:[#allocation2] sm:$0x1] %v15
  $region1: #{tpu_custom_call.1} parent=0
    #allocation3 [shape = 'u8[2048]{0}', space=vmem, size = 0x800, scoped, tag = 'output window, operand 0, single buffered']
    #allocation4 [shape = 's32[1]{0}', space=sflag, size = 0x4, scoped, tag = 'scoped memory for tpu_custom_call.1']
    %17 = vsyncpa [#allocation4], 0
    // Predicated region
    $region2: #{tpu_custom_call.1} parent=1 // pred_check
      _
    $region3: #{tpu_custom_call.1} parent=1 // pred_check_branch
      %19 = sbr.rel (0) target = $region5
    $region4: #{tpu_custom_call.1} parent=1 // pred_region
      _
    $region5: #{tpu_custom_call.1} parent=1 // pred_fallthru
      _
    // Predicated region
    $region6: #{tpu_custom_call.1} parent=1 // pred_check
      _
    $region7: #{tpu_custom_call.1} parent=1 // pred_check_branch
      %21 = sbr.rel (0) target = $region9
    $region8: #{tpu_custom_call.1} parent=1 // pred_region
      _
    $region9: #{tpu_custom_call.1} parent=1 // pred_fallthru
      _
    // Predicated region
    $region10: #{tpu_custom_call.1} parent=1 // pred_check
      _
    $region11: #{tpu_custom_call.1} parent=1 // pred_check_branch
      %23 = sbr.rel (0) target = $region13
    $region12: #{tpu_custom_call.1} parent=1 // pred_region
      _
    $region13: #{tpu_custom_call.1} parent=1 // pred_fallthru
      _
    // Predicated region
    $region14: #{tpu_custom_call.1} parent=1 // pred_check
      _
    $region15: #{tpu_custom_call.1} parent=1 // pred_check_branch
      %25 = sbr.rel (0) target = $region17
    $region16: #{tpu_custom_call.1} parent=1 // pred_region
      _
    $region17: #{tpu_custom_call.1} parent=1 // pred_fallthru
      _
    // Predicated region
    $region18: #{tpu_custom_call.1} parent=1 // pred_check
      _
    $region19: #{tpu_custom_call.1} parent=1 // pred_check_branch
      %27 = sbr.rel (0) target = $region21
    $region20: #{tpu_custom_call.1} parent=1 // pred_region
      _
    $region21: #{tpu_custom_call.1} parent=1 // pred_fallthru
      _
    // Predicated region
    $region22: #{tpu_custom_call.1} parent=1 // pred_check
      _
    $region23: #{tpu_custom_call.1} parent=1 // pred_check_branch
      %29 = sbr.rel (0) target = $region25
    $region24: #{tpu_custom_call.1} parent=1 // pred_region
      _
    $region25: #{tpu_custom_call.1} parent=1 // pred_fallthru
      _
    // Predicated region
    $region26: #{tpu_custom_call.1} parent=1 // pred_check
      _
    $region27: #{tpu_custom_call.1} parent=1 // pred_check_branch
      %31 = sbr.rel (0) target = $region29
    $region28: #{tpu_custom_call.1} parent=1 // pred_region
      _
    $region29: #{tpu_custom_call.1} parent=1 // pred_fallthru
      _
    // Predicated region
    $region30: #{tpu_custom_call.1} parent=1 // pred_check
      _
    $region31: #{tpu_custom_call.1} parent=1 // pred_check_branch
      %33 = sbr.rel (0) target = $region33
    $region32: #{tpu_custom_call.1} parent=1 // pred_region
      _
    $region33: #{tpu_custom_call.1} parent=1 // pred_fallthru
      _
    // Predicated region
    $region34: #{tpu_custom_call.1} parent=1 // pred_check
      _
    $region35: #{tpu_custom_call.1} parent=1 // pred_check_branch
      %35 = sbr.rel (0) target = $region37
    $region36: #{tpu_custom_call.1} parent=1 // pred_region
      _
    $region37: #{tpu_custom_call.1} parent=1 // pred_fallthru
      _
    // Predicated region
    $region38: #{tpu_custom_call.1} parent=1 // pred_check
      _
    $region39: #{tpu_custom_call.1} parent=1 // pred_check_branch
      %37 = sbr.rel (0) target = $region41
    $region40: #{tpu_custom_call.1} parent=1 // pred_region
      _
    $region41: #{tpu_custom_call.1} parent=1 // pred_fallthru
      _
    %v39 = vlaneseq
    %v40 = vshrl.u32 %v39, 7
    %v41 = vadd.s32 %v40, 8
    %v42 = vadd.s32 %v40, 16
    %v43 = vadd.s32 %v40, 24
    %v44 = vadd.s32 %v40, 32
    %v45 = vadd.s32 %v40, 40
    %v46 = vadd.s32 %v40, 48
    %v47 = vadd.s32 %v40, 56
    %v48 = vadd.s32 %v40, 64
    %v49 = vadd.s32 %v40, 72
    %v50 = vadd.s32 %v40, 80
    %v51 = vadd.s32 %v40, 88
    %v52 = vadd.s32 %v40, 96
    %v53 = vadd.s32 %v40, 104
    %v54 = vadd.s32 %v40, 112
    %v55 = vadd.s32 %v40, 120
    %v56 = vld [vmem:[%s0] sm:$0xf]
    %v57 = vlaneseq
    %v58 = vshrl.u32 %v57, 7
    %v59 = vsub.s32 0, %v58
    %v60 = vrot.slane %v56, %v59
    %v61 = vlaneseq
    %v62 = vshrl.u32 %v61, 7
    %v63 = vsub.s32 1, %v62
    %v64 = vrot.slane %v56, %v63
    %v65 = vlaneseq
    %v66 = vshrl.u32 %v65, 7
    %v67 = vsub.s32 2, %v66
    %v68 = vrot.slane %v56, %v67
    %v69 = vlaneseq
    %v70 = vshrl.u32 %v69, 7
    %v71 = vsub.s32 3, %v70
    %v72 = vrot.slane %v56, %v71
    %vm73 = vcmp.eq.s32.totalorder %v40, %v60
    %vm74 = vcmp.eq.s32.totalorder %v40, %v64
    %vm75 = vcmp.eq.s32.totalorder %v40, %v68
    %vm76 = vcmp.eq.s32.totalorder %v40, %v72
    %vm77 = vcmp.eq.s32.totalorder %v41, %v60
    %vm78 = vcmp.eq.s32.totalorder %v41, %v64
    %vm79 = vcmp.eq.s32.totalorder %v41, %v68
    %vm80 = vcmp.eq.s32.totalorder %v41, %v72
    %vm81 = vcmp.eq.s32.totalorder %v42, %v60
    %vm82 = vcmp.eq.s32.totalorder %v42, %v64
    %vm83 = vcmp.eq.s32.totalorder %v42, %v68
    %vm84 = vcmp.eq.s32.totalorder %v42, %v72
    %vm85 = vcmp.eq.s32.totalorder %v43, %v60
    %vm86 = vcmp.eq.s32.totalorder %v43, %v64
    %vm87 = vcmp.eq.s32.totalorder %v43, %v68
    %vm88 = vcmp.eq.s32.totalorder %v43, %v72
    %vm89 = vcmp.eq.s32.totalorder %v44, %v60
    %vm90 = vcmp.eq.s32.totalorder %v44, %v64
    %vm91 = vcmp.eq.s32.totalorder %v44, %v68
    %vm92 = vcmp.eq.s32.totalorder %v44, %v72
    %vm93 = vcmp.eq.s32.totalorder %v45, %v60
    %vm94 = vcmp.eq.s32.totalorder %v45, %v64
    %vm95 = vcmp.eq.s32.totalorder %v45, %v68
    %vm96 = vcmp.eq.s32.totalorder %v45, %v72
    %vm97 = vcmp.eq.s32.totalorder %v46, %v60
    %vm98 = vcmp.eq.s32.totalorder %v46, %v64
    %vm99 = vcmp.eq.s32.totalorder %v46, %v68
    %vm100 = vcmp.eq.s32.totalorder %v46, %v72
    %vm101 = vcmp.eq.s32.totalorder %v47, %v60
    %vm102 = vcmp.eq.s32.totalorder %v47, %v64
    %vm103 = vcmp.eq.s32.totalorder %v47, %v68
    %vm104 = vcmp.eq.s32.totalorder %v47, %v72
    %vm105 = vcmp.eq.s32.totalorder %v48, %v60
    %vm106 = vcmp.eq.s32.totalorder %v48, %v64
    %vm107 = vcmp.eq.s32.totalorder %v48, %v68
    %vm108 = vcmp.eq.s32.totalorder %v48, %v72
    %vm109 = vcmp.eq.s32.totalorder %v49, %v60
    %vm110 = vcmp.eq.s32.totalorder %v49, %v64
    %vm111 = vcmp.eq.s32.totalorder %v49, %v68
    %vm112 = vcmp.eq.s32.totalorder %v49, %v72
    %vm113 = vcmp.eq.s32.totalorder %v50, %v60
    %vm114 = vcmp.eq.s32.totalorder %v50, %v64
    %vm115 = vcmp.eq.s32.totalorder %v50, %v68
    %vm116 = vcmp.eq.s32.totalorder %v50, %v72
    %vm117 = vcmp.eq.s32.totalorder %v51, %v60
    %vm118 = vcmp.eq.s32.totalorder %v51, %v64
    %vm119 = vcmp.eq.s32.totalorder %v51, %v68
    %vm120 = vcmp.eq.s32.totalorder %v51, %v72
    %vm121 = vcmp.eq.s32.totalorder %v52, %v60
    %vm122 = vcmp.eq.s32.totalorder %v52, %v64
    %vm123 = vcmp.eq.s32.totalorder %v52, %v68
    %vm124 = vcmp.eq.s32.totalorder %v52, %v72
    %vm125 = vcmp.eq.s32.totalorder %v53, %v60
    %vm126 = vcmp.eq.s32.totalorder %v53, %v64
    %vm127 = vcmp.eq.s32.totalorder %v53, %v68
    %vm128 = vcmp.eq.s32.totalorder %v53, %v72
    %vm129 = vcmp.eq.s32.totalorder %v54, %v60
    %vm130 = vcmp.eq.s32.totalorder %v54, %v64
    %vm131 = vcmp.eq.s32.totalorder %v54, %v68
    %vm132 = vcmp.eq.s32.totalorder %v54, %v72
    %vm133 = vcmp.eq.s32.totalorder %v55, %v60
    %vm134 = vcmp.eq.s32.totalorder %v55, %v64
    %vm135 = vcmp.eq.s32.totalorder %v55, %v68
    %vm136 = vcmp.eq.s32.totalorder %v55, %v72
    %v137 = vld [vmem:[%s1] sm:$0xf]
    %v138 = vlaneseq
    %v139 = vshrl.u32 %v138, 7
    %v140 = vsub.s32 0, %v139
    %v141 = vrot.slane %v137, %v140
    %v142 = vlaneseq
    %v143 = vshrl.u32 %v142, 7
    %v144 = vsub.s32 1, %v143
    %v145 = vrot.slane %v137, %v144
    %v146 = vlaneseq
    %v147 = vshrl.u32 %v146, 7
    %v148 = vsub.s32 2, %v147
    %v149 = vrot.slane %v137, %v148
    %v150 = vlaneseq
    %v151 = vshrl.u32 %v150, 7
    %v152 = vsub.s32 3, %v151
    %v153 = vrot.slane %v137, %v152
    %vm154 = vcmp.eq.s32.totalorder %v40, %v141
    %vm155 = vcmp.eq.s32.totalorder %v40, %v145
    %vm156 = vcmp.eq.s32.totalorder %v40, %v149
    %vm157 = vcmp.eq.s32.totalorder %v40, %v153
    %vm158 = vcmp.eq.s32.totalorder %v41, %v141
    %vm159 = vcmp.eq.s32.totalorder %v41, %v145
    %vm160 = vcmp.eq.s32.totalorder %v41, %v149
    %vm161 = vcmp.eq.s32.totalorder %v41, %v153
    %vm162 = vcmp.eq.s32.totalorder %v42, %v141
    %vm163 = vcmp.eq.s32.totalorder %v42, %v145
    %vm164 = vcmp.eq.s32.totalorder %v42, %v149
    %vm165 = vcmp.eq.s32.totalorder %v42, %v153
    %vm166 = vcmp.eq.s32.totalorder %v43, %v141
    %vm167 = vcmp.eq.s32.totalorder %v43, %v145
    %vm168 = vcmp.eq.s32.totalorder %v43, %v149
    %vm169 = vcmp.eq.s32.totalorder %v43, %v153
    %vm170 = vcmp.eq.s32.totalorder %v44, %v141
    %vm171 = vcmp.eq.s32.totalorder %v44, %v145
    %vm172 = vcmp.eq.s32.totalorder %v44, %v149
    %vm173 = vcmp.eq.s32.totalorder %v44, %v153
    %vm174 = vcmp.eq.s32.totalorder %v45, %v141
    %vm175 = vcmp.eq.s32.totalorder %v45, %v145
    %vm176 = vcmp.eq.s32.totalorder %v45, %v149
    %vm177 = vcmp.eq.s32.totalorder %v45, %v153
    %vm178 = vcmp.eq.s32.totalorder %v46, %v141
    %vm179 = vcmp.eq.s32.totalorder %v46, %v145
    %vm180 = vcmp.eq.s32.totalorder %v46, %v149
    %vm181 = vcmp.eq.s32.totalorder %v46, %v153
    %vm182 = vcmp.eq.s32.totalorder %v47, %v141
    %vm183 = vcmp.eq.s32.totalorder %v47, %v145
    %vm184 = vcmp.eq.s32.totalorder %v47, %v149
    %vm185 = vcmp.eq.s32.totalorder %v47, %v153
    %vm186 = vcmp.eq.s32.totalorder %v48, %v141
    %vm187 = vcmp.eq.s32.totalorder %v48, %v145
    %vm188 = vcmp.eq.s32.totalorder %v48, %v149
    %vm189 = vcmp.eq.s32.totalorder %v48, %v153
    %vm190 = vcmp.eq.s32.totalorder %v49, %v141
    %vm191 = vcmp.eq.s32.totalorder %v49, %v145
    %vm192 = vcmp.eq.s32.totalorder %v49, %v149
    %vm193 = vcmp.eq.s32.totalorder %v49, %v153
    %vm194 = vcmp.eq.s32.totalorder %v50, %v141
    %vm195 = vcmp.eq.s32.totalorder %v50, %v145
    %vm196 = vcmp.eq.s32.totalorder %v50, %v149
    %vm197 = vcmp.eq.s32.totalorder %v50, %v153
    %vm198 = vcmp.eq.s32.totalorder %v51, %v141
    %vm199 = vcmp.eq.s32.totalorder %v51, %v145
    %vm200 = vcmp.eq.s32.totalorder %v51, %v149
    %vm201 = vcmp.eq.s32.totalorder %v51, %v153
    %vm202 = vcmp.eq.s32.totalorder %v52, %v141
    %vm203 = vcmp.eq.s32.totalorder %v52, %v145
    %vm204 = vcmp.eq.s32.totalorder %v52, %v149
    %vm205 = vcmp.eq.s32.totalorder %v52, %v153
    %vm206 = vcmp.eq.s32.totalorder %v53, %v141
    %vm207 = vcmp.eq.s32.totalorder %v53, %v145
    %vm208 = vcmp.eq.s32.totalorder %v53, %v149
    %vm209 = vcmp.eq.s32.totalorder %v53, %v153
    %vm210 = vcmp.eq.s32.totalorder %v54, %v141
    %vm211 = vcmp.eq.s32.totalorder %v54, %v145
    %vm212 = vcmp.eq.s32.totalorder %v54, %v149
    %vm213 = vcmp.eq.s32.totalorder %v54, %v153
    %vm214 = vcmp.eq.s32.totalorder %v55, %v141
    %vm215 = vcmp.eq.s32.totalorder %v55, %v145
    %vm216 = vcmp.eq.s32.totalorder %v55, %v149
    %vm217 = vcmp.eq.s32.totalorder %v55, %v153
    %vm218 = vmor %vm73, %vm154
    %vm219 = vmor %vm74, %vm155
    %vm220 = vmor %vm75, %vm156
    %vm221 = vmor %vm76, %vm157
    %vm222 = vmor %vm77, %vm158
    %vm223 = vmor %vm78, %vm159
    %vm224 = vmor %vm79, %vm160
    %vm225 = vmor %vm80, %vm161
    %vm226 = vmor %vm81, %vm162
    %vm227 = vmor %vm82, %vm163
    %vm228 = vmor %vm83, %vm164
    %vm229 = vmor %vm84, %vm165
    %vm230 = vmor %vm85, %vm166
    %vm231 = vmor %vm86, %vm167
    %vm232 = vmor %vm87, %vm168
    %vm233 = vmor %vm88, %vm169
    %vm234 = vmor %vm89, %vm170
    %vm235 = vmor %vm90, %vm171
    %vm236 = vmor %vm91, %vm172
    %vm237 = vmor %vm92, %vm173
    %vm238 = vmor %vm93, %vm174
    %vm239 = vmor %vm94, %vm175
    %vm240 = vmor %vm95, %vm176
    %vm241 = vmor %vm96, %vm177
    %vm242 = vmor %vm97, %vm178
    %vm243 = vmor %vm98, %vm179
    %vm244 = vmor %vm99, %vm180
    %vm245 = vmor %vm100, %vm181
    %vm246 = vmor %vm101, %vm182
    %vm247 = vmor %vm102, %vm183
    %vm248 = vmor %vm103, %vm184
    %vm249 = vmor %vm104, %vm185
    %vm250 = vmor %vm105, %vm186
    %vm251 = vmor %vm106, %vm187
    %vm252 = vmor %vm107, %vm188
    %vm253 = vmor %vm108, %vm189
    %vm254 = vmor %vm109, %vm190
    %vm255 = vmor %vm110, %vm191
    %vm256 = vmor %vm111, %vm192
    %vm257 = vmor %vm112, %vm193
    %vm258 = vmor %vm113, %vm194
    %vm259 = vmor %vm114, %vm195
    %vm260 = vmor %vm115, %vm196
    %vm261 = vmor %vm116, %vm197
    %vm262 = vmor %vm117, %vm198
    %vm263 = vmor %vm118, %vm199
    %vm264 = vmor %vm119, %vm200
    %vm265 = vmor %vm120, %vm201
    %vm266 = vmor %vm121, %vm202
    %vm267 = vmor %vm122, %vm203
    %vm268 = vmor %vm123, %vm204
    %vm269 = vmor %vm124, %vm205
    %vm270 = vmor %vm125, %vm206
    %vm271 = vmor %vm126, %vm207
    %vm272 = vmor %vm127, %vm208
    %vm273 = vmor %vm128, %vm209
    %vm274 = vmor %vm129, %vm210
    %vm275 = vmor %vm130, %vm211
    %vm276 = vmor %vm131, %vm212
    %vm277 = vmor %vm132, %vm213
    %vm278 = vmor %vm133, %vm214
    %vm279 = vmor %vm134, %vm215
    %vm280 = vmor %vm135, %vm216
    %vm281 = vmor %vm136, %vm217
    %v282 = vsel %vm218, 1, 0
    %v283 = vsel %vm219, 1, 0
    %v284 = vsel %vm220, 1, 0
    %v285 = vsel %vm221, 1, 0
    %v286 = vsel %vm222, 1, 0
    %v287 = vsel %vm223, 1, 0
    %v288 = vsel %vm224, 1, 0
    %v289 = vsel %vm225, 1, 0
    %v290 = vsel %vm226, 1, 0
    %v291 = vsel %vm227, 1, 0
    %v292 = vsel %vm228, 1, 0
    %v293 = vsel %vm229, 1, 0
    %v294 = vsel %vm230, 1, 0
    %v295 = vsel %vm231, 1, 0
    %v296 = vsel %vm232, 1, 0
    %v297 = vsel %vm233, 1, 0
    %v298 = vsel %vm234, 1, 0
    %v299 = vsel %vm235, 1, 0
    %v300 = vsel %vm236, 1, 0
    %v301 = vsel %vm237, 1, 0
    %v302 = vsel %vm238, 1, 0
    %v303 = vsel %vm239, 1, 0
    %v304 = vsel %vm240, 1, 0
    %v305 = vsel %vm241, 1, 0
    %v306 = vsel %vm242, 1, 0
    %v307 = vsel %vm243, 1, 0
    %v308 = vsel %vm244, 1, 0
    %v309 = vsel %vm245, 1, 0
    %v310 = vsel %vm246, 1, 0
    %v311 = vsel %vm247, 1, 0
    %v312 = vsel %vm248, 1, 0
    %v313 = vsel %vm249, 1, 0
    %v314 = vsel %vm250, 1, 0
    %v315 = vsel %vm251, 1, 0
    %v316 = vsel %vm252, 1, 0
    %v317 = vsel %vm253, 1, 0
    %v318 = vsel %vm254, 1, 0
    %v319 = vsel %vm255, 1, 0
    %v320 = vsel %vm256, 1, 0
    %v321 = vsel %vm257, 1, 0
    %v322 = vsel %vm258, 1, 0
    %v323 = vsel %vm259, 1, 0
    %v324 = vsel %vm260, 1, 0
    %v325 = vsel %vm261, 1, 0
    %v326 = vsel %vm262, 1, 0
    %v327 = vsel %vm263, 1, 0
    %v328 = vsel %vm264, 1, 0
    %v329 = vsel %vm265, 1, 0
    %v330 = vsel %vm266, 1, 0
    %v331 = vsel %vm267, 1, 0
    %v332 = vsel %vm268, 1, 0
    %v333 = vsel %vm269, 1, 0
    %v334 = vsel %vm270, 1, 0
    %v335 = vsel %vm271, 1, 0
    %v336 = vsel %vm272, 1, 0
    %v337 = vsel %vm273, 1, 0
    %v338 = vsel %vm274, 1, 0
    %v339 = vsel %vm275, 1, 0
    %v340 = vsel %vm276, 1, 0
    %v341 = vsel %vm277, 1, 0
    %v342 = vsel %vm278, 1, 0
    %v343 = vsel %vm279, 1, 0
    %v344 = vsel %vm280, 1, 0
    %v345 = vsel %vm281, 1, 0
    %v346 = vcvt.s32.f32 %v282
    %v347 = vcvt.s32.f32 %v283
    %v348 = vcvt.s32.f32 %v284
    %v349 = vcvt.s32.f32 %v285
    %v350 = vcvt.s32.f32 %v286
    %v351 = vcvt.s32.f32 %v287
    %v352 = vcvt.s32.f32 %v288
    %v353 = vcvt.s32.f32 %v289
    %v354 = vcvt.s32.f32 %v290
    %v355 = vcvt.s32.f32 %v291
    %v356 = vcvt.s32.f32 %v292
    %v357 = vcvt.s32.f32 %v293
    %v358 = vcvt.s32.f32 %v294
    %v359 = vcvt.s32.f32 %v295
    %v360 = vcvt.s32.f32 %v296
    %v361 = vcvt.s32.f32 %v297
    %v362 = vcvt.s32.f32 %v298
    %v363 = vcvt.s32.f32 %v299
    %v364 = vcvt.s32.f32 %v300
    %v365 = vcvt.s32.f32 %v301
    %v366 = vcvt.s32.f32 %v302
    %v367 = vcvt.s32.f32 %v303
    %v368 = vcvt.s32.f32 %v304
    %v369 = vcvt.s32.f32 %v305
    %v370 = vcvt.s32.f32 %v306
    %v371 = vcvt.s32.f32 %v307
    %v372 = vcvt.s32.f32 %v308
    %v373 = vcvt.s32.f32 %v309
    %v374 = vcvt.s32.f32 %v310
    %v375 = vcvt.s32.f32 %v311
    %v376 = vcvt.s32.f32 %v312
    %v377 = vcvt.s32.f32 %v313
    %v378 = vcvt.s32.f32 %v314
    %v379 = vcvt.s32.f32 %v315
    %v380 = vcvt.s32.f32 %v316
    %v381 = vcvt.s32.f32 %v317
    %v382 = vcvt.s32.f32 %v318
    %v383 = vcvt.s32.f32 %v319
    %v384 = vcvt.s32.f32 %v320
    %v385 = vcvt.s32.f32 %v321
    %v386 = vcvt.s32.f32 %v322
    %v387 = vcvt.s32.f32 %v323
    %v388 = vcvt.s32.f32 %v324
    %v389 = vcvt.s32.f32 %v325
    %v390 = vcvt.s32.f32 %v326
    %v391 = vcvt.s32.f32 %v327
    %v392 = vcvt.s32.f32 %v328
    %v393 = vcvt.s32.f32 %v329
    %v394 = vcvt.s32.f32 %v330
    %v395 = vcvt.s32.f32 %v331
    %v396 = vcvt.s32.f32 %v332
    %v397 = vcvt.s32.f32 %v333
    %v398 = vcvt.s32.f32 %v334
    %v399 = vcvt.s32.f32 %v335
    %v400 = vcvt.s32.f32 %v336
    %v401 = vcvt.s32.f32 %v337
    %v402 = vcvt.s32.f32 %v338
    %v403 = vcvt.s32.f32 %v339
    %v404 = vcvt.s32.f32 %v340
    %v405 = vcvt.s32.f32 %v341
    %v406 = vcvt.s32.f32 %v342
    %v407 = vcvt.s32.f32 %v343
    %v408 = vcvt.s32.f32 %v344
    %v409 = vcvt.s32.f32 %v345
    %v410 = vpack.c.bf16 %v350, %v346
    %v411 = vpack.c.bf16 %v351, %v347
    %v412 = vpack.c.bf16 %v352, %v348
    %v413 = vpack.c.bf16 %v353, %v349
    %v414 = vpack.c.bf16 %v358, %v354
    %v415 = vpack.c.bf16 %v359, %v355
    %v416 = vpack.c.bf16 %v360, %v356
    %v417 = vpack.c.bf16 %v361, %v357
    %v418 = vpack.c.bf16 %v366, %v362
    %v419 = vpack.c.bf16 %v367, %v363
    %v420 = vpack.c.bf16 %v368, %v364
    %v421 = vpack.c.bf16 %v369, %v365
    %v422 = vpack.c.bf16 %v374, %v370
    %v423 = vpack.c.bf16 %v375, %v371
    %v424 = vpack.c.bf16 %v376, %v372
    %v425 = vpack.c.bf16 %v377, %v373
    %v426 = vpack.c.bf16 %v382, %v378
    %v427 = vpack.c.bf16 %v383, %v379
    %v428 = vpack.c.bf16 %v384, %v380
    %v429 = vpack.c.bf16 %v385, %v381
    %v430 = vpack.c.bf16 %v390, %v386
    %v431 = vpack.c.bf16 %v391, %v387
    %v432 = vpack.c.bf16 %v392, %v388
    %v433 = vpack.c.bf16 %v393, %v389
    %v434 = vpack.c.bf16 %v398, %v394
    %v435 = vpack.c.bf16 %v399, %v395
    %v436 = vpack.c.bf16 %v400, %v396
    %v437 = vpack.c.bf16 %v401, %v397
    %v438 = vpack.c.bf16 %v406, %v402
    %v439 = vpack.c.bf16 %v407, %v403
    %v440 = vpack.c.bf16 %v408, %v404
    %v441 = vpack.c.bf16 %v409, %v405
    %v442 = vld [vmem:[%s2] sm:$0xf]
    %v443 = vld [vmem:[%s2 + $0x4] sm:$0xf]
    %v444 = vld [vmem:[%s2 + $0x8] sm:$0xf]
    %v445 = vld [vmem:[%s2 + $0xc] sm:$0xf]
    %v446 = vld [vmem:[%s3] sm:$0xff]
    %v447 = vld [vmem:[%s3 + $0x8] sm:$0xff]
    %v448 = vld [vmem:[%s3 + $0x10] sm:$0xff]
    %v449 = vld [vmem:[%s3 + $0x18] sm:$0xff]
    %451 = vset.pattern.permute.xlu0 0
    %452 = vperm.xlu0 %451, %v446
    %v453 = vpop.permute.xlu0 %452
    %456 = vset.pattern.permute.xlu0 0
    %457 = vperm.xlu0 %456, %v447
    %v458 = vpop.permute.xlu0 %457
    %461 = vset.pattern.permute.xlu0 0
    %462 = vperm.xlu0 %461, %v448
    %v463 = vpop.permute.xlu0 %462
    %466 = vset.pattern.permute.xlu0 0
    %467 = vperm.xlu0 %466, %v449
    %v468 = vpop.permute.xlu0 %467
    %v474 = vunpack.c.l.b16 %v442
    %v475 = vunpack.c.l.b16 %v443
    %v476 = vunpack.c.l.b16 %v444
    %v477 = vunpack.c.l.b16 %v445
    %v478 = vpack.c.b16 %v475, %v474
    %v479 = vpack.c.b16 %v477, %v476
    %482 = vmatprep.subr.bf16.mxu0 %v439
    %483 = vmatpush1.bf16.msra.mxu0 %v438
    %484 = vmatprep.subr.bf16.mxu0 %v435
    %485 = vmatpush1.bf16.msra.mxu0 %v434
    %486 = vmatprep.subr.bf16.mxu0 %v431
    %487 = vmatpush1.bf16.msra.mxu0 %v430
    %488 = vmatprep.subr.bf16.mxu0 %v427
    %489 = vmatpush1.bf16.msra.mxu0 %v426
    %490 = vmatprep.subr.bf16.mxu0 %v423
    %491 = vmatpush1.bf16.msra.mxu0 %v422
    %492 = vmatprep.subr.bf16.mxu0 %v419
    %493 = vmatpush1.bf16.msra.mxu0 %v418
    %494 = vmatprep.subr.bf16.mxu0 %v415
    %495 = vmatpush1.bf16.msra.mxu0 %v414
    %496 = vmatprep.subr.bf16.mxu0 %v411
    %497 = vmatpush1.bf16.msra.mxu0 %v410
    %498 = vmatprep.subr.bf16.mxu0 0
    %499 = vmatpush2.bf16.msra.mxu0 0
    %500 = vmatprep.subr.bf16.mxu0 0
    %501 = vmatpush2.bf16.msra.mxu0 0
    %502 = vmatprep.subr.bf16.mxu0 0
    %503 = vmatpush2.bf16.msra.mxu0 0
    %504 = vmatprep.subr.bf16.mxu0 0
    %505 = vmatpush2.bf16.msra.mxu0 0
    %506 = vmatprep.subr.bf16.mxu0 0
    %507 = vmatpush2.bf16.msra.mxu0 0
    %508 = vmatprep.subr.bf16.mxu0 0
    %509 = vmatpush2.bf16.msra.mxu0 0
    %510 = vmatprep.subr.bf16.mxu0 0
    %511 = vmatpush2.bf16.msra.mxu0 0
    %512 = vmatprep.subr.bf16.mxu0 0
    %513 = vmatpush2.bf16.msra.mxu0 0
    %514 = vmatprep.mubr.bf16.mxu0 0
    %515 = vmatmul.mubr.bf16.gmra.mxu0 %v478
    %v516 = vpop.f32.mrf.mxu0
    %v517 = vadd.f32 %v453, %v516
    %v518 = vpop.f32.mrf.mxu0
    %v519 = vadd.f32 %v453, %v518
    %v520 = vpop.f32.mrf.mxu0
    %v521 = vadd.f32 %v458, %v520
    %v522 = vpop.f32.mrf.mxu0
    %v523 = vadd.f32 %v458, %v522
    %524 = vmatprep.mubr.bf16.mxu0 0
    %525 = vmatmul.mubr.bf16.gmra.mxu0 %v479
    %v526 = vpop.f32.mrf.mxu0
    %v527 = vadd.f32 %v463, %v526
    %v528 = vpop.f32.mrf.mxu0
    %v529 = vadd.f32 %v463, %v528
    %v530 = vpop.f32.mrf.mxu0
    %v531 = vadd.f32 %v468, %v530
    %v532 = vpop.f32.mrf.mxu0
    %v533 = vadd.f32 %v468, %v532
    %534 = vdwg.mxu0
    %535 = vmatprep.subr.bf16.mxu0 %v441
    %536 = vmatpush1.bf16.msra.mxu0 %v440
    %537 = vmatprep.subr.bf16.mxu0 %v437
    %538 = vmatpush1.bf16.msra.mxu0 %v436
    %539 = vmatprep.subr.bf16.mxu0 %v433
    %540 = vmatpush1.bf16.msra.mxu0 %v432
    %541 = vmatprep.subr.bf16.mxu0 %v429
    %542 = vmatpush1.bf16.msra.mxu0 %v428
    %543 = vmatprep.subr.bf16.mxu0 %v425
    %544 = vmatpush1.bf16.msra.mxu0 %v424
    %545 = vmatprep.subr.bf16.mxu0 %v421
    %546 = vmatpush1.bf16.msra.mxu0 %v420
    %547 = vmatprep.subr.bf16.mxu0 %v417
    %548 = vmatpush1.bf16.msra.mxu0 %v416
    %549 = vmatprep.subr.bf16.mxu0 %v413
    %550 = vmatpush1.bf16.msra.mxu0 %v412
    %551 = vmatprep.subr.bf16.mxu0 0
    %552 = vmatpush2.bf16.msra.mxu0 0
    %553 = vmatprep.subr.bf16.mxu0 0
    %554 = vmatpush2.bf16.msra.mxu0 0
    %555 = vmatprep.subr.bf16.mxu0 0
    %556 = vmatpush2.bf16.msra.mxu0 0
    %557 = vmatprep.subr.bf16.mxu0 0
    %558 = vmatpush2.bf16.msra.mxu0 0
    %559 = vmatprep.subr.bf16.mxu0 0
    %560 = vmatpush2.bf16.msra.mxu0 0
    %561 = vmatprep.subr.bf16.mxu0 0
    %562 = vmatpush2.bf16.msra.mxu0 0
    %563 = vmatprep.subr.bf16.mxu0 0
    %564 = vmatpush2.bf16.msra.mxu0 0
    %565 = vmatprep.subr.bf16.mxu0 0
    %566 = vmatpush2.bf16.msra.mxu0 0
    %567 = vmatprep.mubr.bf16.mxu0 0
    %568 = vmatmul.mubr.bf16.gmra.mxu0 %v478
    %v569 = vpop.f32.mrf.mxu0
    %v570 = vadd.f32 %v453, %v569
    %v571 = vpop.f32.mrf.mxu0
    %v572 = vadd.f32 %v453, %v571
    %v573 = vpop.f32.mrf.mxu0
    %v574 = vadd.f32 %v458, %v573
    %v575 = vpop.f32.mrf.mxu0
    %v576 = vadd.f32 %v458, %v575
    %577 = vmatprep.mubr.bf16.mxu0 0
    %578 = vmatmul.mubr.bf16.gmra.mxu0 %v479
    %v579 = vpop.f32.mrf.mxu0
    %v580 = vadd.f32 %v463, %v579
    %v581 = vpop.f32.mrf.mxu0
    %v582 = vadd.f32 %v463, %v581
    %v583 = vpop.f32.mrf.mxu0
    %v584 = vadd.f32 %v468, %v583
    %v585 = vpop.f32.mrf.mxu0
    %v586 = vadd.f32 %v468, %v585
    %587 = vdwg.mxu0
    %v588 = vmax.f32 %v517, 0.0
    %v589 = vmax.f32 %v519, 0.0
    %v590 = vmax.f32 %v570, 0.0
    %v591 = vmax.f32 %v572, 0.0
    %v592 = vmax.f32 %v521, 0.0
    %v593 = vmax.f32 %v523, 0.0
    %v594 = vmax.f32 %v574, 0.0
    %v595 = vmax.f32 %v576, 0.0
    %v596 = vmax.f32 %v527, 0.0
    %v597 = vmax.f32 %v529, 0.0
    %v598 = vmax.f32 %v580, 0.0
    %v599 = vmax.f32 %v582, 0.0
    %v600 = vmax.f32 %v531, 0.0
    %v601 = vmax.f32 %v533, 0.0
    %v602 = vmax.f32 %v584, 0.0
    %v603 = vmax.f32 %v586, 0.0
    %v604 = vld [vmem:[%s4] sm:$0xf]
    %v605 = vld [vmem:[%s4 + $0x4] sm:$0xf]
    %v606 = vpack.c.bf16 %v592, %v588
    %v607 = vpack.c.bf16 %v593, %v589
    %v608 = vpack.c.bf16 %v594, %v590
    %v609 = vpack.c.bf16 %v595, %v591
    %v610 = vpack.c.bf16 %v600, %v596
    %v611 = vpack.c.bf16 %v601, %v597
    %v612 = vpack.c.bf16 %v602, %v598
    %v613 = vpack.c.bf16 %v603, %v599
    %v614 = vld [vmem:[%s5] sm:$0xff]
    %v615 = vld [vmem:[%s5 + $0x8] sm:$0xff]
    %617 = vset.pattern.permute.xlu0 0
    %618 = vperm.xlu0 %617, %v614
    %v619 = vpop.permute.xlu0 %618
    %622 = vset.pattern.permute.xlu0 0
    %623 = vperm.xlu0 %622, %v615
    %v624 = vpop.permute.xlu0 %623
    %v628 = vunpack.c.l.b16 %v604
    %v629 = vunpack.c.l.b16 %v605
    %v630 = vpack.c.b16 %v629, %v628
    %vm631 = vcmask 261120
    %v633 = vsel %vm631, %v630, 0
    %635 = vmatprep.subr.bf16.mxu0 0
    %636 = vmatpush1.bf16.msra.mxu0 0
    %637 = vmatprep.subr.bf16.mxu0 0
    %638 = vmatpush1.bf16.msra.mxu0 0
    %639 = vmatprep.subr.bf16.mxu0 0
    %640 = vmatpush1.bf16.msra.mxu0 0
    %641 = vmatprep.subr.bf16.mxu0 0
    %642 = vmatpush1.bf16.msra.mxu0 0
    %643 = vmatprep.subr.bf16.mxu0 0
    %644 = vmatpush1.bf16.msra.mxu0 0
    %645 = vmatprep.subr.bf16.mxu0 0
    %646 = vmatpush1.bf16.msra.mxu0 0
    %647 = vmatprep.subr.bf16.mxu0 %v611
    %648 = vmatpush1.bf16.msra.mxu0 %v610
    %649 = vmatprep.subr.bf16.mxu0 %v607
    %650 = vmatpush1.bf16.msra.mxu0 %v606
    %651 = vmatprep.subr.bf16.mxu0 0
    %652 = vmatpush2.bf16.msra.mxu0 0
    %653 = vmatprep.subr.bf16.mxu0 0
    %654 = vmatpush2.bf16.msra.mxu0 0
    %655 = vmatprep.subr.bf16.mxu0 0
    %656 = vmatpush2.bf16.msra.mxu0 0
    %657 = vmatprep.subr.bf16.mxu0 0
    %658 = vmatpush2.bf16.msra.mxu0 0
    %659 = vmatprep.subr.bf16.mxu0 0
    %660 = vmatpush2.bf16.msra.mxu0 0
    %661 = vmatprep.subr.bf16.mxu0 0
    %662 = vmatpush2.bf16.msra.mxu0 0
    %663 = vmatprep.subr.bf16.mxu0 0
    %664 = vmatpush2.bf16.msra.mxu0 0
    %665 = vmatprep.subr.bf16.mxu0 0
    %666 = vmatpush2.bf16.msra.mxu0 0
    %667 = vmatprep.mubr.bf16.mxu0 0
    %668 = vmatmul.mubr.bf16.gmra.mxu0 %v633
    %v669 = vpop.f32.mrf.mxu0
    %v670 = vadd.f32 %v619, %v669
    %v671 = vpop.f32.mrf.mxu0
    %v672 = vadd.f32 %v619, %v671
    %v673 = vpop.f32.mrf.mxu0
    %v674 = vadd.f32 %v624, %v673
    %v675 = vpop.f32.mrf.mxu0
    %v676 = vadd.f32 %v624, %v675
    %677 = vdwg.mxu0
    %678 = vmatprep.subr.bf16.mxu0 0
    %679 = vmatpush1.bf16.msra.mxu0 0
    %680 = vmatprep.subr.bf16.mxu0 0
    %681 = vmatpush1.bf16.msra.mxu0 0
    %682 = vmatprep.subr.bf16.mxu0 0
    %683 = vmatpush1.bf16.msra.mxu0 0
    %684 = vmatprep.subr.bf16.mxu0 0
    %685 = vmatpush1.bf16.msra.mxu0 0
    %686 = vmatprep.subr.bf16.mxu0 0
    %687 = vmatpush1.bf16.msra.mxu0 0
    %688 = vmatprep.subr.bf16.mxu0 0
    %689 = vmatpush1.bf16.msra.mxu0 0
    %690 = vmatprep.subr.bf16.mxu0 %v613
    %691 = vmatpush1.bf16.msra.mxu0 %v612
    %692 = vmatprep.subr.bf16.mxu0 %v609
    %693 = vmatpush1.bf16.msra.mxu0 %v608
    %694 = vmatprep.subr.bf16.mxu0 0
    %695 = vmatpush2.bf16.msra.mxu0 0
    %696 = vmatprep.subr.bf16.mxu0 0
    %697 = vmatpush2.bf16.msra.mxu0 0
    %698 = vmatprep.subr.bf16.mxu0 0
    %699 = vmatpush2.bf16.msra.mxu0 0
    %700 = vmatprep.subr.bf16.mxu0 0
    %701 = vmatpush2.bf16.msra.mxu0 0
    %702 = vmatprep.subr.bf16.mxu0 0
    %703 = vmatpush2.bf16.msra.mxu0 0
    %704 = vmatprep.subr.bf16.mxu0 0
    %705 = vmatpush2.bf16.msra.mxu0 0
    %706 = vmatprep.subr.bf16.mxu0 0
    %707 = vmatpush2.bf16.msra.mxu0 0
    %708 = vmatprep.subr.bf16.mxu0 0
    %709 = vmatpush2.bf16.msra.mxu0 0
    %710 = vmatprep.mubr.bf16.mxu0 0
    %711 = vmatmul.mubr.bf16.gmra.mxu0 %v633
    %v712 = vpop.f32.mrf.mxu0
    %v713 = vadd.f32 %v619, %v712
    %v714 = vpop.f32.mrf.mxu0
    %v715 = vadd.f32 %v619, %v714
    %v716 = vpop.f32.mrf.mxu0
    %v717 = vadd.f32 %v624, %v716
    %v718 = vpop.f32.mrf.mxu0
    %v719 = vadd.f32 %v624, %v718
    %720 = vdwg.mxu0
    %v721 = vmax.f32 %v670, 0.0
    %v722 = vmax.f32 %v672, 0.0
    %v723 = vmax.f32 %v713, 0.0
    %v724 = vmax.f32 %v715, 0.0
    %v725 = vmax.f32 %v674, 0.0
    %v726 = vmax.f32 %v676, 0.0
    %v727 = vmax.f32 %v717, 0.0
    %v728 = vmax.f32 %v719, 0.0
    %v729 = vld [vmem:[%s6] sm:$0xf]
    %v730 = vpack.c.bf16 %v725, %v721
    %v731 = vpack.c.bf16 %v726, %v722
    %v732 = vpack.c.bf16 %v727, %v723
    %v733 = vpack.c.bf16 %v728, %v724
    %v734 = vld [vmem:[%s7] sm:$0xff]
    %736 = vset.pattern.permute.xlu0 0
    %737 = vperm.xlu0 %736, %v734
    %v738 = vpop.permute.xlu0 %737
    %vm740 = vcmask 130048
    %v742 = vsel %vm740, %v729, 0
    %744 = vmatprep.subr.bf16.mxu0 0
    %745 = vmatpush1.bf16.msra.mxu0 0
    %746 = vmatprep.subr.bf16.mxu0 0
    %747 = vmatpush1.bf16.msra.mxu0 0
    %748 = vmatprep.subr.bf16.mxu0 0
    %749 = vmatpush1.bf16.msra.mxu0 0
    %750 = vmatprep.subr.bf16.mxu0 0
    %751 = vmatpush1.bf16.msra.mxu0 0
    %752 = vmatprep.subr.bf16.mxu0 0
    %753 = vmatpush1.bf16.msra.mxu0 0
    %754 = vmatprep.subr.bf16.mxu0 0
    %755 = vmatpush1.bf16.msra.mxu0 0
    %756 = vmatprep.subr.bf16.mxu0 0
    %757 = vmatpush1.bf16.msra.mxu0 0
    %758 = vmatprep.subr.bf16.mxu0 %v731
    %759 = vmatpush1.bf16.msra.mxu0 %v730
    %760 = vmatprep.subr.bf16.mxu0 0
    %761 = vmatpush2.bf16.msra.mxu0 0
    %762 = vmatprep.subr.bf16.mxu0 0
    %763 = vmatpush2.bf16.msra.mxu0 0
    %764 = vmatprep.subr.bf16.mxu0 0
    %765 = vmatpush2.bf16.msra.mxu0 0
    %766 = vmatprep.subr.bf16.mxu0 0
    %767 = vmatpush2.bf16.msra.mxu0 0
    %768 = vmatprep.subr.bf16.mxu0 0
    %769 = vmatpush2.bf16.msra.mxu0 0
    %770 = vmatprep.subr.bf16.mxu0 0
    %771 = vmatpush2.bf16.msra.mxu0 0
    %772 = vmatprep.subr.bf16.mxu0 0
    %773 = vmatpush2.bf16.msra.mxu0 0
    %774 = vmatprep.subr.bf16.mxu0 0
    %775 = vmatpush2.bf16.msra.mxu0 0
    %776 = vmatprep.mubr.bf16.mxu0 0
    %777 = vmatmul.mubr.bf16.gmra.mxu0 %v742
    %v778 = vpop.f32.mrf.mxu0
    %v779 = vadd.f32 %v738, %v778
    %v780 = vpop.f32.mrf.mxu0
    %v781 = vadd.f32 %v738, %v780
    %v782 = vpop.f32.mrf.mxu0
    %v783 = vpop.f32.mrf.mxu0
    %784 = vdwg.mxu0
    %785 = vmatprep.subr.bf16.mxu0 0
    %786 = vmatpush1.bf16.msra.mxu0 0
    %787 = vmatprep.subr.bf16.mxu0 0
    %788 = vmatpush1.bf16.msra.mxu0 0
    %789 = vmatprep.subr.bf16.mxu0 0
    %790 = vmatpush1.bf16.msra.mxu0 0
    %791 = vmatprep.subr.bf16.mxu0 0
    %792 = vmatpush1.bf16.msra.mxu0 0
    %793 = vmatprep.subr.bf16.mxu0 0
    %794 = vmatpush1.bf16.msra.mxu0 0
    %795 = vmatprep.subr.bf16.mxu0 0
    %796 = vmatpush1.bf16.msra.mxu0 0
    %797 = vmatprep.subr.bf16.mxu0 0
    %798 = vmatpush1.bf16.msra.mxu0 0
    %799 = vmatprep.subr.bf16.mxu0 %v733
    %800 = vmatpush1.bf16.msra.mxu0 %v732
    %801 = vmatprep.subr.bf16.mxu0 0
    %802 = vmatpush2.bf16.msra.mxu0 0
    %803 = vmatprep.subr.bf16.mxu0 0
    %804 = vmatpush2.bf16.msra.mxu0 0
    %805 = vmatprep.subr.bf16.mxu0 0
    %806 = vmatpush2.bf16.msra.mxu0 0
    %807 = vmatprep.subr.bf16.mxu0 0
    %808 = vmatpush2.bf16.msra.mxu0 0
    %809 = vmatprep.subr.bf16.mxu0 0
    %810 = vmatpush2.bf16.msra.mxu0 0
    %811 = vmatprep.subr.bf16.mxu0 0
    %812 = vmatpush2.bf16.msra.mxu0 0
    %813 = vmatprep.subr.bf16.mxu0 0
    %814 = vmatpush2.bf16.msra.mxu0 0
    %815 = vmatprep.subr.bf16.mxu0 0
    %816 = vmatpush2.bf16.msra.mxu0 0
    %817 = vmatprep.mubr.bf16.mxu0 0
    %818 = vmatmul.mubr.bf16.gmra.mxu0 %v742
    %v819 = vpop.f32.mrf.mxu0
    %v820 = vadd.f32 %v738, %v819
    %v821 = vpop.f32.mrf.mxu0
    %v822 = vadd.f32 %v738, %v821
    %v823 = vpop.f32.mrf.mxu0
    %v824 = vpop.f32.mrf.mxu0
    %825 = vdwg.mxu0
    %v826 = vmax.f32 %v779, 0.0
    %v827 = vmax.f32 %v781, 0.0
    %v828 = vmax.f32 %v820, 0.0
    %v829 = vmax.f32 %v822, 0.0
    %v830 = vld [vmem:[%s8] sm:$0x1]
    %v831 = vpack.c.bf16 %v826, %v826
    %v832 = vpack.c.bf16 %v827, %v827
    %v833 = vpack.c.bf16 %v828, %v828
    %v834 = vpack.c.bf16 %v829, %v829
    %v835 = vld [vmem:[#allocation2] sm:$0x1]
    %837 = vset.pattern.permute.xlu0 0
    %838 = vperm.xlu0 %837, %v835
    %v839 = vpop.permute.xlu0 %838
    %v841 = vlaneseq
    %v842 = vshrl.u32 %v841, 7
    %v843 = vsub.s32 0, %v842
    %v844 = vrot.slane %v839, %v843
    %vm845 = vcmask 64512
    %v847 = vsel %vm845, %v830, 0
    %vm849 = vcmask 1043456
    %v851 = vsel %vm849, %v831, 0
    %v854 = vsel %vm849, %v832, 0
    %v857 = vsel %vm849, %v833, 0
    %v860 = vsel %vm849, %v834, 0
    %862 = vmatprep.subr.bf16.mxu0 0
    %863 = vmatpush1.bf16.msra.mxu0 0
    %864 = vmatprep.subr.bf16.mxu0 0
    %865 = vmatpush1.bf16.msra.mxu0 0
    %866 = vmatprep.subr.bf16.mxu0 0
    %867 = vmatpush1.bf16.msra.mxu0 0
    %868 = vmatprep.subr.bf16.mxu0 0
    %869 = vmatpush1.bf16.msra.mxu0 0
    %870 = vmatprep.subr.bf16.mxu0 0
    %871 = vmatpush1.bf16.msra.mxu0 0
    %872 = vmatprep.subr.bf16.mxu0 0
    %873 = vmatpush1.bf16.msra.mxu0 0
    %874 = vmatprep.subr.bf16.mxu0 0
    %875 = vmatpush1.bf16.msra.mxu0 0
    %876 = vmatprep.subr.bf16.mxu0 %v854
    %877 = vmatpush1.bf16.msra.mxu0 %v851
    %878 = vmatprep.subr.bf16.mxu0 0
    %879 = vmatpush2.bf16.msra.mxu0 0
    %880 = vmatprep.subr.bf16.mxu0 0
    %881 = vmatpush2.bf16.msra.mxu0 0
    %882 = vmatprep.subr.bf16.mxu0 0
    %883 = vmatpush2.bf16.msra.mxu0 0
    %884 = vmatprep.subr.bf16.mxu0 0
    %885 = vmatpush2.bf16.msra.mxu0 0
    %886 = vmatprep.subr.bf16.mxu0 0
    %887 = vmatpush2.bf16.msra.mxu0 0
    %888 = vmatprep.subr.bf16.mxu0 0
    %889 = vmatpush2.bf16.msra.mxu0 0
    %890 = vmatprep.subr.bf16.mxu0 0
    %891 = vmatpush2.bf16.msra.mxu0 0
    %892 = vmatprep.subr.bf16.mxu0 0
    %893 = vmatpush2.bf16.msra.mxu0 0
    %894 = vmatprep.mubr.bf16.mxu0 0
    %895 = vmatmul.mubr.bf16.gmra.mxu0 %v847
    %v896 = vpop.f32.mrf.mxu0
    %v897 = vadd.f32 %v844, %v896
    %v898 = vpop.f32.mrf.mxu0
    %v899 = vadd.f32 %v844, %v898
    %v900 = vpop.f32.mrf.mxu0
    %v901 = vpop.f32.mrf.mxu0
    %902 = vdwg.mxu0
    %903 = vmatprep.subr.bf16.mxu0 0
    %904 = vmatpush1.bf16.msra.mxu0 0
    %905 = vmatprep.subr.bf16.mxu0 0
    %906 = vmatpush1.bf16.msra.mxu0 0
    %907 = vmatprep.subr.bf16.mxu0 0
    %908 = vmatpush1.bf16.msra.mxu0 0
    %909 = vmatprep.subr.bf16.mxu0 0
    %910 = vmatpush1.bf16.msra.mxu0 0
    %911 = vmatprep.subr.bf16.mxu0 0
    %912 = vmatpush1.bf16.msra.mxu0 0
    %913 = vmatprep.subr.bf16.mxu0 0
    %914 = vmatpush1.bf16.msra.mxu0 0
    %915 = vmatprep.subr.bf16.mxu0 0
    %916 = vmatpush1.bf16.msra.mxu0 0
    %917 = vmatprep.subr.bf16.mxu0 %v860
    %918 = vmatpush1.bf16.msra.mxu0 %v857
    %919 = vmatprep.subr.bf16.mxu0 0
    %920 = vmatpush2.bf16.msra.mxu0 0
    %921 = vmatprep.subr.bf16.mxu0 0
    %922 = vmatpush2.bf16.msra.mxu0 0
    %923 = vmatprep.subr.bf16.mxu0 0
    %924 = vmatpush2.bf16.msra.mxu0 0
    %925 = vmatprep.subr.bf16.mxu0 0
    %926 = vmatpush2.bf16.msra.mxu0 0
    %927 = vmatprep.subr.bf16.mxu0 0
    %928 = vmatpush2.bf16.msra.mxu0 0
    %929 = vmatprep.subr.bf16.mxu0 0
    %930 = vmatpush2.bf16.msra.mxu0 0
    %931 = vmatprep.subr.bf16.mxu0 0
    %932 = vmatpush2.bf16.msra.mxu0 0
    %933 = vmatprep.subr.bf16.mxu0 0
    %934 = vmatpush2.bf16.msra.mxu0 0
    %935 = vmatprep.mubr.bf16.mxu0 0
    %936 = vmatmul.mubr.bf16.gmra.mxu0 %v847
    %v937 = vpop.f32.mrf.mxu0
    %v938 = vadd.f32 %v844, %v937
    %v939 = vpop.f32.mrf.mxu0
    %v940 = vadd.f32 %v844, %v939
    %v941 = vpop.f32.mrf.mxu0
    %v942 = vpop.f32.mrf.mxu0
    %943 = vdwg.mxu0
    %v948 = vcombine.low %v897, %v899
    %v949 = vcombine.low %v938, %v940
    %v951 = vunpack.c.l.s4 1966171168
    %v952 = vunpack.c.0.s8 %v951
    %v953 = vlaneseq
    %v954 = vshrl.u32 %v953, 7
    %v955 = vsub.s32 %v952, %v954
    %v956 = vrot.slane %v948, %v955
    %v958 = vunpack.c.l.s4 1966171168
    %v959 = vunpack.c.0.s8 %v958
    %v960 = vlaneseq
    %v961 = vshrl.u32 %v960, 7
    %v962 = vsub.s32 %v959, %v961
    %v963 = vrot.slane %v949, %v962
    %v964 = vcombine.low %v956, %v963
    %v966 = vunpack.c.l.s4 1966171168
    %v967 = vunpack.c.0.s8 %v966
    %v968 = vlaneseq
    %v969 = vshrl.u32 %v968, 7
    %v970 = vsub.s32 %v967, %v969
    %v971 = vrot.slane %v964, %v970
    %v973 = vlaneseq
    %vm974 = vcmp.ge.s32.totalorder %v973, 0
    %vm975 = vcmp.lt.s32.totalorder %v973, 512
    %vm976 = vmand %vm974, %vm975
    %977 = vst.msk [vmem:[#allocation3] sm:$0xf] %vm976, %v971
    // Predicated region
    $region42: #{tpu_custom_call.1} parent=1 // pred_check
      _
    $region43: #{tpu_custom_call.1} parent=1 // pred_check_branch
      %979 = sbr.rel (0) target = $region45
    $region44: #{tpu_custom_call.1} parent=1 // pred_region
      %s981 = ssub.s32 64, 64
      %982 = vsyncadd [#allocation4], %s981
      %s984 = sshll.u32 [#allocation3], 4
      %s985 = int_to_ptr.vmem [resolvable:$true] %s984
      %987 = dma.vmem_to_hbm [thread:$0]  %s985, 64, %s10, [#allocation4]
    $region45: #{tpu_custom_call.1} parent=1 // pred_fallthru
      _
    // Predicated region
    $region46: #{tpu_custom_call.1} parent=1 // pred_check
      _
    $region47: #{tpu_custom_call.1} parent=1 // pred_check_branch
      %989 = sbr.rel (0) target = $region49
    $region48: #{tpu_custom_call.1} parent=1 // pred_region
      %990 = dma.done [#allocation4], 64
    $region49: #{tpu_custom_call.1} parent=1 // pred_fallthru
      _
    %991 = vsyncpa [#allocation4], 1

</llo_original>
